<compile_context>
chip_gen: v7x
topology: tpu7x:2x2x1
jax: 0.10.0
libtpu: 0.0.40
codegen_flags: <defaults>
</compile_context>

<pallas_src>
import jax
import jax.numpy as jnp
from jax.experimental import pallas as pl
from jax.experimental.pallas import tpu as pltpu


def _round_up(x, m):
    return ((x + m - 1) // m) * m


# ---------------------------------------------------------------------------
# Kernels
# ---------------------------------------------------------------------------
def _ffn_kernel_fused(x_ref, w1_ref, b1_ref, w2_ref, b2_ref, o_ref):
    """Whole hidden dim resident: single pass per row tile, no accumulator."""
    h = jnp.dot(x_ref[...], w1_ref[...], preferred_element_type=jnp.float32)
    h = jnp.maximum(h + b1_ref[...], 0.0)
    y = jnp.dot(h.astype(w2_ref.dtype), w2_ref[...],
                preferred_element_type=jnp.float32)
    o_ref[...] = (y + b2_ref[...]).astype(o_ref.dtype)


def _ffn_kernel_chunked(x_ref, w1_ref, b1_ref, w2_ref, b2_ref, o_ref, acc_ref):
    """Hidden dim chunked over grid axis 1 ("arbitrary"); f32 accumulation."""
    k = pl.program_id(1)

    h = jnp.dot(x_ref[...], w1_ref[...], preferred_element_type=jnp.float32)
    h = jnp.maximum(h + b1_ref[...], 0.0)
    contrib = jnp.dot(h.astype(w2_ref.dtype), w2_ref[...],
                      preferred_element_type=jnp.float32)

    @pl.when(k == 0)
    def _():
        acc_ref[...] = contrib          # direct assign: no zero-init pass

    @pl.when(k > 0)
    def _():
        acc_ref[...] += contrib

    @pl.when(k == pl.num_programs(1) - 1)
    def _():
        o_ref[...] = (acc_ref[...] + b2_ref[...]).astype(o_ref.dtype)


# ---------------------------------------------------------------------------
# Helpers
# ---------------------------------------------------------------------------
def _bspec(shape, index_map, *, single_buffered=False):
    """BlockSpec; constant-index blocks request single-buffering (saves VMEM)."""
    if single_buffered:
        try:
            return pl.BlockSpec(shape, index_map, pipeline_mode=pl.Buffered(1))
        except (AttributeError, TypeError):
            pass  # older Pallas without pipeline_mode: fall back to default.
    return pl.BlockSpec(shape, index_map)


def _vmem_capacity_bytes():
    """Physical VMEM of the local chip; conservative 64 MiB (v7x) fallback."""
    default = 64 * 1024 * 1024
    try:
        info = pltpu.get_tpu_info()
        cap = getattr(info, "vmem_capacity_bytes", None)
        if isinstance(cap, int) and cap > 0:
            return cap
    except Exception:
        pass
    return default


def _core_parallel_semantics():
    """Return CORE_PARALLEL only when the chip reports >= 2 TensorCores."""
    try:
        info = pltpu.get_tpu_info()
        for attr in ("num_cores", "core_count", "tensorcore_count",
                     "num_tensorcores", "cores_per_chip"):
            v = getattr(info, attr, None)
            if isinstance(v, int) and v >= 2 and hasattr(pltpu, "CORE_PARALLEL"):
                return pltpu.CORE_PARALLEL
    except Exception:
        pass
    return None


def _choose_config(n_rows, d_in, d_hid, xsz, wsz, bsz, osz, budget):
    """Pick (tm, tk, num_k) under a VMEM byte budget.

    Path A (preferred): whole hidden dim resident -> weights DMA'd once.
    Path B: hidden chunking -> weights re-streamed per row tile, so maximize tm.
    """
    rows_cap = _round_up(max(n_rows, 1), 8)

    def clamp_tm(t):
        t = min(t, rows_cap)
        return max(8, (t // 8) * 8)

    tm_candidates = sorted(
        {clamp_tm(t) for t in (1024, 768, 512, 256, 128, 64, 32, 16, 8)},
        reverse=True)

    # --- Path A: full weight residency (single-buffered weights). ----------
    full_w = 2 * d_in * d_hid * wsz + (d_in + d_hid) * bsz
    for tm in tm_candidates:
        row_bytes = tm * (2 * d_in * (xsz + osz)     # x / out double-buffered
                          + d_hid * 4 + d_in * 4)    # h and y f32 temporaries
        if full_w + row_bytes <= budget:
            return tm, d_hid, 1

    # --- Path B: hidden-dim chunking (prefer largest row tile). ------------
    tk_candidates = [c for c in (4096, 2048, 1024, 512, 256, 128)
                     if c < d_hid and d_hid % c == 0]
    for tm in tm_candidates:
        for tk in tk_candidates:
            chunk = (4 * d_in * tk * wsz             # w1 + w2 chunks, 2 buffers
                     + 2 * tk * bsz + d_in * bsz     # b1 chunks + b2
                     + tm * 2 * d_in * (xsz + osz)   # x / out double-buffered
                     + tm * d_in * 4                 # f32 accumulator scratch
                     + tm * tk * 4 + tm * d_in * 4)  # h / y temporaries
            if chunk <= budget:
                return tm, tk, d_hid // tk

    # Fallback: whole hidden, smallest row tile (d_hid with no 128-multiple
    # divisor cannot be chunked exactly).
    # TODO(synk): ragged hidden chunks would need masked accumulation.
    return clamp_tm(8), d_hid, 1


# ---------------------------------------------------------------------------
# Public entry point
# ---------------------------------------------------------------------------
def positionwise_feed_forward(x, w1, b1, w2, b2, *, vmem_budget_bytes=None):
    """x: (..., d_in) -> (..., d_in).  out = relu(x @ w1 + b1) @ w2 + b2."""
    orig_shape = x.shape
    d_in = orig_shape[-1]
    d_hid = w1.shape[1]
    x2d = x.reshape(-1, d_in)
    n_rows = x2d.shape[0]

    xsz = x2d.dtype.itemsize
    wsz = w1.dtype.itemsize
    bsz = b1.dtype.itemsize
    osz = xsz

    capacity = _vmem_capacity_bytes()
    hard_cap = int(capacity * 0.9)
    budget = int(capacity * 0.75) if vmem_budget_bytes is None \
        else int(vmem_budget_bytes)
    budget = min(budget, hard_cap)

    tm, tk, num_k = _choose_config(n_rows, d_in, d_hid, xsz, wsz, bsz, osz,
                                   budget)
    n_row_tiles = int(pl.cdiv(n_rows, tm))

    b1_2d = b1.reshape(1, d_hid)
    b2_2d = b2.reshape(1, d_in)

    # Explicit VMEM limit from the actual footprint (never above hard_cap).
    if num_k == 1:
        footprint = (2 * d_in * d_hid * wsz + (d_in + d_hid) * bsz
                     + tm * (2 * d_in * (xsz + osz) + d_hid * 4 + d_in * 4))
    else:
        footprint = (4 * d_in * tk * wsz + 2 * tk * bsz + d_in * bsz
                     + tm * (2 * d_in * (xsz + osz) + d_in * 4
                             + tk * 4 + d_in * 4))
    vmem_limit = int(min(max(int(footprint * 1.25), 32 * 1024 * 1024),
                         hard_cap))

    # Honest cost estimate: chunked path re-streams all weights per row tile.
    flops = 4 * n_rows * d_in * d_hid
    w_bytes = w1.size * wsz + w2.size * wsz + b1.size * bsz
    weight_traffic = w_bytes if num_k == 1 else n_row_tiles * w_bytes
    bytes_accessed = int(x2d.size * xsz + n_rows * d_in * osz
                         + weight_traffic + b2.size * bsz)
    cost = pl.CostEstimate(flops=int(flops), transcendentals=0,
                           bytes_accessed=bytes_accessed)

    def build(row_sem, red_sem):
        if num_k == 1:
            grid_spec = pltpu.PrefetchScalarGridSpec(
                num_scalar_prefetch=0,
                grid=(n_row_tiles,),
                in_specs=[
                    pl.BlockSpec((tm, d_in), lambda i: (i, 0)),              # x
                    _bspec((d_in, d_hid), lambda i: (0, 0),
                           single_buffered=True),                           # w1
                    _bspec((1, d_hid), lambda i: (0, 0),
                           single_buffered=True),                           # b1
                    _bspec((d_hid, d_in), lambda i: (0, 0),
                           single_buffered=True),                           # w2
                    _bspec((1, d_in), lambda i: (0, 0),
                           single_buffered=True),                           # b2
                ],
                out_specs=pl.BlockSpec((tm, d_in), lambda i: (i, 0)),
                scratch_shapes=[],
            )
            kernel = _ffn_kernel_fused
            dims = (row_sem,)
        else:
            grid_spec = pltpu.PrefetchScalarGridSpec(
                num_scalar_prefetch=0,
                grid=(n_row_tiles, num_k),
                in_specs=[
                    pl.BlockSpec((tm, d_in), lambda i, k: (i, 0)),           # x
                    pl.BlockSpec((d_in, tk), lambda i, k: (0, k)),           # w1
                    pl.BlockSpec((1, tk), lambda i, k: (0, k)),              # b1
                    pl.BlockSpec((tk, d_in), lambda i, k: (k, 0)),           # w2
                    _bspec((1, d_in), lambda i, k: (0, 0),
                           single_buffered=True),                           # b2
                ],
                out_specs=pl.BlockSpec((tm, d_in), lambda i, k: (i, 0)),
                scratch_shapes=[pltpu.VMEM((tm, d_in), jnp.float32)],
            )
            kernel = _ffn_kernel_chunked
            dims = (row_sem, red_sem)

        return pl.pallas_call(
            kernel,
            out_shape=jax.ShapeDtypeStruct((n_rows, d_in), x.dtype),
            grid_spec=grid_spec,
            compiler_params=pltpu.CompilerParams(
                dimension_semantics=dims,
                vmem_limit_bytes=vmem_limit),
            cost_estimate=cost,
        )

    core_parallel = _core_parallel_semantics()
    if core_parallel is not None and n_row_tiles >= 2:
        try:  # v7x: shard the row axis across both TensorCores.
            arb = getattr(pltpu, "ARBITRARY", "arbitrary")
            out = build(core_parallel, arb)(x2d, w1, b1_2d, w2, b2_2d)
        except Exception:
            out = build("parallel", "arbitrary")(x2d, w1, b1_2d, w2, b2_2d)
    else:
        out = build("parallel", "arbitrary")(x2d, w1, b1_2d, w2, b2_2d)

    return out.reshape(orig_shape)


# ---------------------------------------------------------------------------
# Test harness
# ---------------------------------------------------------------------------
def _make_params(key, d_in, d_hid, dtype=jnp.float32):
    kw1, kb1, kw2, kb2 = jax.random.split(key, 4)
    bound1 = 1.0 / (d_in ** 0.5)
    bound2 = 1.0 / (d_hid ** 0.5)
    w1 = jax.random.uniform(kw1, (d_in, d_hid), minval=-bound1, maxval=bound1,
                            dtype=dtype)
    b1 = jax.random.uniform(kb1, (d_hid,), minval=-bound1, maxval=bound1,
                            dtype=dtype)
    w2 = jax.random.uniform(kw2, (d_hid, d_in), minval=-bound2, maxval=bound2,
                            dtype=dtype)
    b2 = jax.random.uniform(kb2, (d_in,), minval=-bound2, maxval=bound2,
                            dtype=dtype)
    return w1, b1, w2, b2


def _ref_ffn(x, w1, b1, w2, b2):
    return jnp.maximum(x @ w1 + b1, 0.0) @ w2 + b2


if __name__ == "__main__":
    key = jax.random.PRNGKey(0)
    k1, k2, k3, k4, k5, k6 = jax.random.split(key, 6)

    # --- Test 1: small module-consistent shapes (fused, full-weight path) --
    batch, seq, d_in, d_hid = 2, 8, 32, 64
    x = jax.random.normal(k1, (batch, seq, d_in), dtype=jnp.float32)
    w1, b1, w2, b2 = _make_params(k2, d_in, d_hid)

    out = jax.block_until_ready(positionwise_feed_forward(x, w1, b1, w2, b2))
    ref = _ref_ffn(x, w1, b1, w2, b2)
    assert out.shape == (batch, seq, d_in)
    assert jnp.allclose(out, ref, atol=1e-5, rtol=1e-5)

    # --- Test 2: larger dims, non-multiple-of-128 rows (still fused) -------
    batch2, seq2, d_in2, d_hid2 = 2, 72, 128, 4096
    x2 = jax.random.normal(k3, (batch2, seq2, d_in2), dtype=jnp.float32)
    w1b, b1b, w2b, b2b = _make_params(k4, d_in2, d_hid2)

    out2 = jax.block_until_ready(
        positionwise_feed_forward(x2, w1b, b1b, w2b, b2b))
    ref2 = _ref_ffn(x2, w1b, b1b, w2b, b2b)
    assert out2.shape == (batch2, seq2, d_in2)
    assert jnp.allclose(out2, ref2, atol=2e-3, rtol=2e-3)

    # --- Test 3: tiny forced VMEM budget -> exercises the chunked path -----
    batch3, seq3, d_in3, d_hid3 = 2, 8, 128, 512
    x3 = jax.random.normal(k5, (batch3, seq3, d_in3), dtype=jnp.float32)
    w1c, b1c, w2c, b2c = _make_params(k6, d_in3, d_hid3)

    out3 = jax.block_until_ready(
        positionwise_feed_forward(x3, w1c, b1c, w2c, b2c,
                                  vmem_budget_bytes=400_000))
    ref3 = _ref_ffn(x3, w1c, b1c, w2c, b2c)
    assert out3.shape == (batch3, seq3, d_in3)
    assert jnp.allclose(out3, ref3, atol=1e-3, rtol=1e-3)

    print("KERNEL_OK")
</pallas_src>

<mosaic_0001>
module attributes {stable_mosaic.version = 11 : i64} {
  func.func @_ffn_kernel_fused(%arg0: i32, %arg1: memref<16x32xf32, #tpu.memory_space<vmem>>, %arg2: memref<32x64xf32, #tpu.memory_space<vmem>>, %arg3: memref<1x64xf32, #tpu.memory_space<vmem>>, %arg4: memref<64x32xf32, #tpu.memory_space<vmem>>, %arg5: memref<1x32xf32, #tpu.memory_space<vmem>>, %arg6: memref<16x32xf32, #tpu.memory_space<vmem>>) attributes {dimension_semantics = [#tpu.dimension_semantics<parallel>], iteration_bounds = array<i64: 1>, scalar_prefetch = 0 : i64, scratch_operands = 0 : i64, tpu.core_type = #tpu.core_type<tc>, window_params = [{transform_indices = @transform_0, window_bounds = array<i64: 16, 32>}, {pipeline_mode = #tpu.pipeline_mode<synchronous>, transform_indices = @transform_1, window_bounds = array<i64: 32, 64>}, {pipeline_mode = #tpu.pipeline_mode<synchronous>, transform_indices = @transform_2, window_bounds = array<i64: 1, 64>}, {pipeline_mode = #tpu.pipeline_mode<synchronous>, transform_indices = @transform_3, window_bounds = array<i64: 64, 32>}, {pipeline_mode = #tpu.pipeline_mode<synchronous>, transform_indices = @transform_4, window_bounds = array<i64: 1, 32>}, {transform_indices = @transform_5, window_bounds = array<i64: 16, 32>}]} {
    %c0 = arith.constant 0 : index
    %c0_0 = arith.constant 0 : index
    %0 = vector.load %arg1[%c0, %c0_0] : memref<16x32xf32, #tpu.memory_space<vmem>>, vector<16x32xf32>
    %c0_1 = arith.constant 0 : index
    %c0_2 = arith.constant 0 : index
    %1 = vector.load %arg2[%c0_1, %c0_2] : memref<32x64xf32, #tpu.memory_space<vmem>>, vector<32x64xf32>
    %cst = arith.constant dense<0.000000e+00> : vector<16x64xf32>
    %2 = tpu.matmul %0, %1, %cst {dimension_numbers = #tpu.dot_dimension_numbers<[1], [0], [0], [1], [0, 0, 1, 1], [], []>} : vector<16x32xf32>, vector<32x64xf32>, vector<16x64xf32> -> vector<16x64xf32>
    %c0_3 = arith.constant 0 : index
    %c0_4 = arith.constant 0 : index
    %3 = vector.load %arg3[%c0_3, %c0_4] : memref<1x64xf32, #tpu.memory_space<vmem>>, vector<1x64xf32>
    %4 = vector.broadcast %3 : vector<1x64xf32> to vector<16x64xf32>
    %5 = arith.addf %2, %4 : vector<16x64xf32>
    %cst_5 = arith.constant 0.000000e+00 : f32
    %6 = vector.broadcast %cst_5 : f32 to vector<16x64xf32>
    %7 = arith.maximumf %5, %6 : vector<16x64xf32>
    %c0_6 = arith.constant 0 : index
    %c0_7 = arith.constant 0 : index
    %8 = vector.load %arg4[%c0_6, %c0_7] : memref<64x32xf32, #tpu.memory_space<vmem>>, vector<64x32xf32>
    %cst_8 = arith.constant dense<0.000000e+00> : vector<16x32xf32>
    %9 = tpu.matmul %7, %8, %cst_8 {dimension_numbers = #tpu.dot_dimension_numbers<[1], [0], [0], [1], [0, 0, 1, 1], [], []>} : vector<16x64xf32>, vector<64x32xf32>, vector<16x32xf32> -> vector<16x32xf32>
    %c0_9 = arith.constant 0 : index
    %c0_10 = arith.constant 0 : index
    %10 = vector.load %arg5[%c0_9, %c0_10] : memref<1x32xf32, #tpu.memory_space<vmem>>, vector<1x32xf32>
    %11 = vector.broadcast %10 : vector<1x32xf32> to vector<16x32xf32>
    %12 = arith.addf %9, %11 : vector<16x32xf32>
    %c0_11 = arith.constant 0 : index
    %c0_12 = arith.constant 0 : index
    %13 = vector.load %arg6[%c0_11, %c0_12] : memref<16x32xf32, #tpu.memory_space<vmem>>, vector<16x32xf32>
    tpu.vector_store %arg6[%c0_11, %c0_12], %12 {strides = array<i32>} : memref<16x32xf32, #tpu.memory_space<vmem>>, vector<16x32xf32>,
    return
  }
  func.func @transform_0(%arg0: i32) -> (i32, i32) {
    %c0_i32 = arith.constant 0 : i32
    %c0_i32_0 = arith.constant 0 : i32
    return %arg0, %c0_i32 : i32, i32
  }
  func.func @transform_1(%arg0: i32) -> (i32, i32) {
    %c0_i32 = arith.constant 0 : i32
    %c0_i32_0 = arith.constant 0 : i32
    %c0_i32_1 = arith.constant 0 : i32
    return %c0_i32, %c0_i32_0 : i32, i32
  }
  func.func @transform_2(%arg0: i32) -> (i32, i32) {
    %c0_i32 = arith.constant 0 : i32
    %c0_i32_0 = arith.constant 0 : i32
    %c0_i32_1 = arith.constant 0 : i32
    return %c0_i32, %c0_i32_0 : i32, i32
  }
  func.func @transform_3(%arg0: i32) -> (i32, i32) {
    %c0_i32 = arith.constant 0 : i32
    %c0_i32_0 = arith.constant 0 : i32
    %c0_i32_1 = arith.constant 0 : i32
    return %c0_i32, %c0_i32_0 : i32, i32
  }
  func.func @transform_4(%arg0: i32) -> (i32, i32) {
    %c0_i32 = arith.constant 0 : i32
    %c0_i32_0 = arith.constant 0 : i32
    %c0_i32_1 = arith.constant 0 : i32
    return %c0_i32, %c0_i32_0 : i32, i32
  }
  func.func @transform_5(%arg0: i32) -> (i32, i32) {
    %c0_i32 = arith.constant 0 : i32
    %c0_i32_0 = arith.constant 0 : i32
    return %arg0, %c0_i32 : i32, i32
  }
}

</mosaic_0001>

<llo_original>
// kernel: tpu_custom_call.1
$region0: #{tpu_custom_call.1}
  #allocation0 [shape = 'u32[]', space=smem, size = 0x4, offset = 0x4, fixed_abs, tag = 'smem constant byte address 0x4 - core index']
  #allocation1 [shape = 'u32[144,128]{1,0:T(1,128)}', space=vmem, size = 0x12000, scoped, tag = 'internal scratch']
  %s0 = inlined_call_operand.vmem [shape: f32[16,32], index: 0, kind: input, shape index: {}]
  %s1 = inlined_call_operand.vmem [shape: f32[32,64], index: 1, kind: input, shape index: {}]
  %s2 = inlined_call_operand.vmem [shape: f32[1,64], index: 2, kind: input, shape index: {}]
  %s3 = inlined_call_operand.vmem [shape: f32[64,32], index: 3, kind: input, shape index: {}]
  %s4 = inlined_call_operand.vmem [shape: f32[1,32], index: 4, kind: input, shape index: {}]
  %s5 = inlined_call_operand.hbm [shape: f32[16,32], index: 5, kind: output, shape index: {}]
  %s6 = sld [smem:[#allocation0]]
  $region30: #{tpu_custom_call.1} parent=0
    _
  %s8 = ssub.s32 1, %s6
  %s9 = scalar_select 0, %s8, %s6
  $region1: #{tpu_custom_call.1} parent=0
    #allocation2 [shape = 'u8[8192]{0}', space=vmem, size = 0x2000, scoped, tag = 'output window, operand 0, single buffered']
    #allocation3 [shape = 's32[1]{0}', space=sflag, size = 0x4, scoped, tag = 'scoped memory for tpu_custom_call.1']
    %10 = vsyncpa [#allocation3], 0
    // Predicated region
    $region2: #{tpu_custom_call.1} parent=1 // pred_check
      _
    $region3: #{tpu_custom_call.1} parent=1 // pred_check_branch
      %12 = sbr.rel (0) target = $region5
    $region4: #{tpu_custom_call.1} parent=1 // pred_region
      _
    $region5: #{tpu_custom_call.1} parent=1 // pred_fallthru
      _
    // Predicated region
    $region6: #{tpu_custom_call.1} parent=1 // pred_check
      _
    $region7: #{tpu_custom_call.1} parent=1 // pred_check_branch
      %14 = sbr.rel (0) target = $region9
    $region8: #{tpu_custom_call.1} parent=1 // pred_region
      _
    $region9: #{tpu_custom_call.1} parent=1 // pred_fallthru
      _
    // Predicated region
    $region10: #{tpu_custom_call.1} parent=1 // pred_check
      _
    $region11: #{tpu_custom_call.1} parent=1 // pred_check_branch
      %16 = sbr.rel (0) target = $region13
    $region12: #{tpu_custom_call.1} parent=1 // pred_region
      _
    $region13: #{tpu_custom_call.1} parent=1 // pred_fallthru
      _
    // Predicated region
    $region14: #{tpu_custom_call.1} parent=1 // pred_check
      _
    $region15: #{tpu_custom_call.1} parent=1 // pred_check_branch
      %18 = sbr.rel (0) target = $region17
    $region16: #{tpu_custom_call.1} parent=1 // pred_region
      _
    $region17: #{tpu_custom_call.1} parent=1 // pred_fallthru
      _
    // Predicated region
    $region18: #{tpu_custom_call.1} parent=1 // pred_check
      _
    $region19: #{tpu_custom_call.1} parent=1 // pred_check_branch
      %20 = sbr.rel (0) target = $region21
    $region20: #{tpu_custom_call.1} parent=1 // pred_region
      _
    $region21: #{tpu_custom_call.1} parent=1 // pred_fallthru
      _
    %v21 = vld [vmem:[%s0] sm:$0xff]
    %v22 = vld [vmem:[%s0 + $0x8] sm:$0xff]
    %v23 = vld [vmem:[%s1] sm:$0xff]
    %v24 = vld [vmem:[%s1 + $0x8] sm:$0xff]
    %v25 = vld [vmem:[%s1 + $0x10] sm:$0xff]
    %v26 = vld [vmem:[%s1 + $0x18] sm:$0xff]
    %v27 = vld [vmem:[%s2] sm:$0x1]
    %v29 = vlaneseq
    %v30 = vshrl.u32 %v29, 7
    %v31 = vsub.s32 0, %v30
    %v32 = vrot.slane %v27, %v31
    %vm34 = vcmask 261120
    %v36 = vsel %vm34, %v21, 0
    %v39 = vsel %vm34, %v22, 0
    %41 = vmatprep.subr.mxu0 0.0
    %42 = vmatpush1.msra.mxu0 %v23
    %43 = vmatprep.subr.mxu0 0.0
    %44 = vmatpush1.msra.mxu0 %v24
    %45 = vmatprep.subr.mxu0 0.0
    %46 = vmatpush1.msra.mxu0 %v25
    %47 = vmatprep.subr.mxu0 0.0
    %48 = vmatpush1.msra.mxu0 %v26
    %49 = vmatprep.subr.mxu0 0.0
    %50 = vmatpush1.msra.mxu0 0.0
    %51 = vmatprep.subr.mxu0 0.0
    %52 = vmatpush1.msra.mxu0 0.0
    %53 = vmatprep.subr.mxu0 0.0
    %54 = vmatpush1.msra.mxu0 0.0
    %55 = vmatprep.subr.mxu0 0.0
    %56 = vmatpush1.msra.mxu0 0.0
    %57 = vmatprep.subr.mxu0 0.0
    %58 = vmatpush1.msra.mxu0 0.0
    %59 = vmatprep.subr.mxu0 0.0
    %60 = vmatpush1.msra.mxu0 0.0
    %61 = vmatprep.subr.mxu0 0.0
    %62 = vmatpush1.msra.mxu0 0.0
    %63 = vmatprep.subr.mxu0 0.0
    %64 = vmatpush1.msra.mxu0 0.0
    %65 = vmatprep.subr.mxu0 0.0
    %66 = vmatpush1.msra.mxu0 0.0
    %67 = vmatprep.subr.mxu0 0.0
    %68 = vmatpush1.msra.mxu0 0.0
    %69 = vmatprep.subr.mxu0 0.0
    %70 = vmatpush1.msra.mxu0 0.0
    %71 = vmatprep.subr.mxu0 0.0
    %72 = vmatpush1.msra.mxu0 0.0
    %73 = vmatprep.subr.mxu0 0.0
    %74 = vmatpush1.msra.mxu0 0.0
    %75 = vmatprep.subr.mxu0 0.0
    %76 = vmatpush1.msra.mxu0 0.0
    %77 = vmatprep.subr.mxu0 0.0
    %78 = vmatpush1.msra.mxu0 0.0
    %79 = vmatprep.subr.mxu0 0.0
    %80 = vmatpush1.msra.mxu0 0.0
    %81 = vmatprep.subr.mxu0 0.0
    %82 = vmatpush1.msra.mxu0 0.0
    %83 = vmatprep.subr.mxu0 0.0
    %84 = vmatpush1.msra.mxu0 0.0
    %85 = vmatprep.subr.mxu0 0.0
    %86 = vmatpush1.msra.mxu0 0.0
    %87 = vmatprep.subr.mxu0 0.0
    %88 = vmatpush1.msra.mxu0 0.0
    %89 = vmatprep.subr.mxu0 0.0
    %90 = vmatpush1.msra.mxu0 0.0
    %91 = vmatprep.subr.mxu0 0.0
    %92 = vmatpush1.msra.mxu0 0.0
    %93 = vmatprep.subr.mxu0 0.0
    %94 = vmatpush1.msra.mxu0 0.0
    %95 = vmatprep.subr.mxu0 0.0
    %96 = vmatpush1.msra.mxu0 0.0
    %97 = vmatprep.subr.mxu0 0.0
    %98 = vmatpush1.msra.mxu0 0.0
    %99 = vmatprep.subr.mxu0 0.0
    %100 = vmatpush1.msra.mxu0 0.0
    %101 = vmatprep.subr.mxu0 0.0
    %102 = vmatpush1.msra.mxu0 0.0
    %103 = vmatprep.subr.mxu0 0.0
    %104 = vmatpush1.msra.mxu0 0.0
    %105 = vmatprep.mubr.f32.mxu0 0.0
    %106 = vmatmul.mubr.f32.gmra.mrb[0].mxu0 %v36
    %v107 = vpop.f32.mrb[0].mxu0
    %v108 = vadd.f32 %v32, %v107
    %v109 = vpop.f32.mrb[0].mxu0
    %110 = vmatprep.mubr.f32.mxu0 0.0
    %111 = vmatmul.mubr.f32.gmra.mrb[0].mxu0 %v39
    %v112 = vpop.f32.mrb[0].mxu0
    %v113 = vadd.f32 %v32, %v112
    %v114 = vpop.f32.mrb[0].mxu0
    %115 = vdwg.mxu0
    %v116 = vmax.f32 %v108, 0.0
    %v117 = vmax.f32 %v113, 0.0
    %v118 = vld [vmem:[%s3] sm:$0xff]
    %v119 = vld [vmem:[%s3 + $0x8] sm:$0xff]
    %v120 = vld [vmem:[%s3 + $0x10] sm:$0xff]
    %v121 = vld [vmem:[%s3 + $0x18] sm:$0xff]
    %v122 = vld [vmem:[%s3 + $0x20] sm:$0xff]
    %v123 = vld [vmem:[%s3 + $0x28] sm:$0xff]
    %v124 = vld [vmem:[%s3 + $0x30] sm:$0xff]
    %v125 = vld [vmem:[%s3 + $0x38] sm:$0xff]
    %v126 = vld [vmem:[%s4] sm:$0x1]
    %v128 = vlaneseq
    %v129 = vshrl.u32 %v128, 7
    %v130 = vsub.s32 0, %v129
    %v131 = vrot.slane %v126, %v130
    %vm133 = vcmask 523264
    %v135 = vsel %vm133, %v116, 0
    %v138 = vsel %vm133, %v117, 0
    %140 = vmatprep.subr.mxu0 0.0
    %141 = vmatpush1.msra.mxu0 %v118
    %142 = vmatprep.subr.mxu0 0.0
    %143 = vmatpush1.msra.mxu0 %v119
    %144 = vmatprep.subr.mxu0 0.0
    %145 = vmatpush1.msra.mxu0 %v120
    %146 = vmatprep.subr.mxu0 0.0
    %147 = vmatpush1.msra.mxu0 %v121
    %148 = vmatprep.subr.mxu0 0.0
    %149 = vmatpush1.msra.mxu0 %v122
    %150 = vmatprep.subr.mxu0 0.0
    %151 = vmatpush1.msra.mxu0 %v123
    %152 = vmatprep.subr.mxu0 0.0
    %153 = vmatpush1.msra.mxu0 %v124
    %154 = vmatprep.subr.mxu0 0.0
    %155 = vmatpush1.msra.mxu0 %v125
    %156 = vmatprep.subr.mxu0 0.0
    %157 = vmatpush1.msra.mxu0 0.0
    %158 = vmatprep.subr.mxu0 0.0
    %159 = vmatpush1.msra.mxu0 0.0
    %160 = vmatprep.subr.mxu0 0.0
    %161 = vmatpush1.msra.mxu0 0.0
    %162 = vmatprep.subr.mxu0 0.0
    %163 = vmatpush1.msra.mxu0 0.0
    %164 = vmatprep.subr.mxu0 0.0
    %165 = vmatpush1.msra.mxu0 0.0
    %166 = vmatprep.subr.mxu0 0.0
    %167 = vmatpush1.msra.mxu0 0.0
    %168 = vmatprep.subr.mxu0 0.0
    %169 = vmatpush1.msra.mxu0 0.0
    %170 = vmatprep.subr.mxu0 0.0
    %171 = vmatpush1.msra.mxu0 0.0
    %172 = vmatprep.subr.mxu0 0.0
    %173 = vmatpush1.msra.mxu0 0.0
    %174 = vmatprep.subr.mxu0 0.0
    %175 = vmatpush1.msra.mxu0 0.0
    %176 = vmatprep.subr.mxu0 0.0
    %177 = vmatpush1.msra.mxu0 0.0
    %178 = vmatprep.subr.mxu0 0.0
    %179 = vmatpush1.msra.mxu0 0.0
    %180 = vmatprep.subr.mxu0 0.0
    %181 = vmatpush1.msra.mxu0 0.0
    %182 = vmatprep.subr.mxu0 0.0
    %183 = vmatpush1.msra.mxu0 0.0
    %184 = vmatprep.subr.mxu0 0.0
    %185 = vmatpush1.msra.mxu0 0.0
    %186 = vmatprep.subr.mxu0 0.0
    %187 = vmatpush1.msra.mxu0 0.0
    %188 = vmatprep.subr.mxu0 0.0
    %189 = vmatpush1.msra.mxu0 0.0
    %190 = vmatprep.subr.mxu0 0.0
    %191 = vmatpush1.msra.mxu0 0.0
    %192 = vmatprep.subr.mxu0 0.0
    %193 = vmatpush1.msra.mxu0 0.0
    %194 = vmatprep.subr.mxu0 0.0
    %195 = vmatpush1.msra.mxu0 0.0
    %196 = vmatprep.subr.mxu0 0.0
    %197 = vmatpush1.msra.mxu0 0.0
    %198 = vmatprep.subr.mxu0 0.0
    %199 = vmatpush1.msra.mxu0 0.0
    %200 = vmatprep.subr.mxu0 0.0
    %201 = vmatpush1.msra.mxu0 0.0
    %202 = vmatprep.subr.mxu0 0.0
    %203 = vmatpush1.msra.mxu0 0.0
    %204 = vmatprep.mubr.f32.mxu0 0.0
    %205 = vmatmul.mubr.f32.gmra.mrb[0].mxu0 %v135
    %v206 = vpop.f32.mrb[0].mxu0
    %v207 = vadd.f32 %v131, %v206
    %v208 = vpop.f32.mrb[0].mxu0
    %209 = vmatprep.mubr.f32.mxu0 0.0
    %210 = vmatmul.mubr.f32.gmra.mrb[0].mxu0 %v138
    %v211 = vpop.f32.mrb[0].mxu0
    %v212 = vadd.f32 %v131, %v211
    %v213 = vpop.f32.mrb[0].mxu0
    %214 = vdwg.mxu0
    %215 = vst.msk [vmem:[#allocation2] sm:$0xff] %vm34, %v207
    %216 = vst.msk [vmem:[#allocation2 + $0x8] sm:$0xff] %vm34, %v212
    // Predicated region
    $region22: #{tpu_custom_call.1} parent=1 // pred_check
      _
    $region23: #{tpu_custom_call.1} parent=1 // pred_check_branch
      %218 = sbr.rel (0) target = $region25
    $region24: #{tpu_custom_call.1} parent=1 // pred_region
      %s220 = ssub.s32 256, 256
      %221 = vsyncadd [#allocation3], %s220
      %s222 = sshll.u32 [#allocation2], 4
      %s223 = int_to_ptr.vmem [resolvable:$true] %s222
      %228 = dma.vmem_to_hbm [thread:$0]  %s223, 256, %s5, [#allocation3], 128, 128, 8
    $region25: #{tpu_custom_call.1} parent=1 // pred_fallthru
      _
    // Predicated region
    $region26: #{tpu_custom_call.1} parent=1 // pred_check
      _
    $region27: #{tpu_custom_call.1} parent=1 // pred_check_branch
      %230 = sbr.rel (0) target = $region29
    $region28: #{tpu_custom_call.1} parent=1 // pred_region
      %231 = dma.done [#allocation3], 256
    $region29: #{tpu_custom_call.1} parent=1 // pred_fallthru
      _
    %232 = vsyncpa [#allocation3], 1

</llo_original>
